<compile_context>
chip_gen: v5e
topology: v5e:2x2
jax: 0.10.0
libtpu: 0.0.40
codegen_flags: <defaults>
</compile_context>

<pallas_src>
import functools
import numpy as np
import jax
import jax.numpy as jnp
from jax.experimental import pallas as pl
from jax.experimental.pallas import tpu as pltpu

LANE = 128
_ROW_TILE_CAP_BYTES = 1 * 1024 * 1024      # max bytes along the lane (feature) axis per tile


def _sublane_granule(dtype):
    """Sublane rounding granule so packed sub-32-bit tiles stay vreg-dense."""
    return max(8, 32 // jnp.dtype(dtype).itemsize)   # f32 -> 8, bf16/f16 -> 16, int8/fp8 -> 32


def _vmem_capacity_bytes():
    try:
        return int(pltpu.get_tpu_info().vmem_capacity_bytes)
    except Exception:
        return 64 * 1024 * 1024                       # conservative (v7x-sized) fallback


def _choose_tiles(B, L, dtype, tile_target):
    """Pick (TB, TL, granule): biggest tile <= tile_target obeying (granule, 128) rules."""
    itemsize = jnp.dtype(dtype).itemsize
    gran = _sublane_granule(dtype)
    # Lane-axis tile: whole row when small, else a 128-multiple near the cap, kept
    # small enough that the batch tile still reaches a full sublane granule.
    row_cap = min(_ROW_TILE_CAP_BYTES, tile_target // (2 * gran))
    if L * itemsize <= row_cap:
        tl = L                                         # == full dim -> no 128 rule
    else:
        tl = max(LANE, (row_cap // itemsize) // LANE * LANE)
        if L % LANE == 0:
            # Prefer an even 128-multiple divisor of L (no masked edge block),
            # but only if it shrinks the tile by at most 2x.
            for cand in range(tl, max(LANE, tl // 2) - 1, -LANE):
                if L % cand == 0:
                    tl = cand
                    break
    # Batch-axis tile: as many samples as fit the tile budget, granule-rounded.
    tb_budget = max(1, tile_target // (tl * itemsize))
    if tb_budget >= B:
        tb = B                                         # == full dim -> no sublane rule
    else:
        tb = min(B, max(gran, (tb_budget // gran) * gran))
    return tb, tl, gran


def _drop_path_kernel(scale_ref, x_ref, o_ref, *, tb, grid_b):
    # scale_ref : (B_pad, 1) f32, fully VMEM-resident (index_map pinned to block 0)
    # x_ref/o_ref: (tb, tl) elementwise tile of the flattened input / output
    if grid_b == 1:
        s = scale_ref[...]                              # whole scale == this tile's rows
    else:
        start = pl.multiple_of(pl.program_id(0) * tb, 8)   # tb is a multiple of 8 here
        s = scale_ref[pl.ds(start, tb), :]
    # Keep the mask/keep_prob scale in f32; cast only the stored result to x's dtype.
    o_ref[...] = (x_ref[...].astype(jnp.float32) * s).astype(o_ref.dtype)


def drop_path_pallas(x, drop_prob, *, key, training=True, in_place=False):
    """Pallas DropPath forward. Always returns just the output tensor."""
    drop_prob = float(drop_prob)          # static config scalar, as in the PyTorch module
    if drop_prob == 0.0 or not training:
        return x

    keep_prob = 1.0 - drop_prob
    orig_shape = x.shape
    B = int(orig_shape[0])
    L = int(np.prod(orig_shape[1:])) if len(orig_shape) > 1 else 1
    dtype = x.dtype
    itemsize = jnp.dtype(dtype).itemsize

    # Per-sample keep mask, same construction as the PyTorch reference:
    # floor(keep_prob + U[0,1)) -> 1 with prob keep_prob, else 0.  Fold 1/keep_prob
    # in here so the kernel is a single broadcast multiply.
    u = jax.random.uniform(key, (B, 1), dtype=jnp.float32)
    scale = jnp.floor(keep_prob + u) * (1.0 / keep_prob)          # (B, 1) f32

    # Free, layout-preserving flatten: one HBM pass through the kernel.
    x2 = x.reshape(B, L)

    # Generation-aware tile / VMEM budget: ~8 MiB tiles on v7x (64 MiB VMEM),
    # ~16 MiB on v5e/v6e (128 MiB VMEM); x + out are double-buffered (4x tile).
    vmem_cap = _vmem_capacity_bytes()
    vmem_limit = min(vmem_cap * 3 // 4, 96 * 1024 * 1024)
    tile_target = max(4 * 1024 * 1024, min(vmem_limit // 6, 16 * 1024 * 1024))

    tb, tl, gran = _choose_tiles(B, L, dtype, tile_target)

    # v7x megacore: make sure the parallel grid has >= 2 blocks when there is
    # enough work to be worth splitting across the two TensorCores.
    if pl.cdiv(B, tb) * pl.cdiv(L, tl) == 1 and B * L * itemsize > (1 << 20):
        if tl % (2 * LANE) == 0:
            tl //= 2
        elif tb % (2 * gran) == 0:
            tb //= 2

    grid_b = pl.cdiv(B, tb)
    grid_l = pl.cdiv(L, tl)

    # Keep the per-sample scale fully VMEM-resident (one DMA total) instead of a
    # tiny lane-masked DMA per batch block; pad it so the in-kernel dynamic slice
    # for the (Pallas-masked) edge batch block never reads out of bounds.
    b_pad = grid_b * tb
    if b_pad != B:
        scale = jnp.pad(scale, ((0, b_pad - B), (0, 0)))

    kernel = functools.partial(_drop_path_kernel, tb=tb, grid_b=grid_b)

    out2 = pl.pallas_call(
        kernel,
        out_shape=jax.ShapeDtypeStruct((B, L), dtype),
        grid_spec=pltpu.PrefetchScalarGridSpec(
            num_scalar_prefetch=0,
            grid=(grid_b, grid_l),
            in_specs=[
                pl.BlockSpec((b_pad, 1), lambda i, j: (0, 0)),   # resident per-sample scale
                pl.BlockSpec((tb, tl), lambda i, j: (i, j)),     # x tile
            ],
            out_specs=pl.BlockSpec((tb, tl), lambda i, j: (i, j)),
        ),
        compiler_params=pltpu.CompilerParams(
            dimension_semantics=("parallel", "parallel"),
            vmem_limit_bytes=int(vmem_limit)),
        cost_estimate=pl.CostEstimate(
            flops=B * L,
            transcendentals=0,
            bytes_accessed=2 * B * L * itemsize + b_pad * 4),
        input_output_aliases=({1: 0} if in_place else {}),
    )(scale, x2)

    return out2.reshape(orig_shape)


if __name__ == "__main__":
    key = jax.random.PRNGKey(0)
    k_x, k_mask = jax.random.split(key)

    # Small NCHW input consistent with typical DropPath usage inside a conv/ViT block.
    B, C, H, W = 2, 4, 16, 16
    x = jax.random.normal(k_x, (B, C, H, W), dtype=jnp.float32)

    drop_prob = 0.25
    keep_prob = 1.0 - drop_prob

    # --- training=True path (kernel) ---
    out = drop_path_pallas(x, drop_prob, key=k_mask, training=True)
    out = jax.block_until_ready(out)

    # Reference in plain JAX using the identical mask construction (same key).
    u = jax.random.uniform(k_mask, (B, 1), dtype=jnp.float32)
    mask = jnp.floor(keep_prob + u).reshape(B, 1, 1, 1)
    ref = (x / keep_prob) * mask
    np.testing.assert_allclose(np.asarray(out), np.asarray(ref), rtol=1e-6, atol=1e-6)

    # --- eval path and drop_prob=0 path are identity (same return type) ---
    out_eval = drop_path_pallas(x, drop_prob, key=k_mask, training=False)
    np.testing.assert_allclose(np.asarray(jax.block_until_ready(out_eval)), np.asarray(x))
    out_p0 = drop_path_pallas(x, 0.0, key=k_mask, training=True)
    np.testing.assert_allclose(np.asarray(jax.block_until_ready(out_p0)), np.asarray(x))

    # --- bf16 sanity check (exercises dtype-aware granule + f32 compute path) ---
    B2_, D_ = 16, 4096
    xb = jax.random.normal(k_x, (B2_, D_), dtype=jnp.bfloat16)
    ob = jax.block_until_ready(drop_path_pallas(xb, 0.5, key=k_mask, training=True))
    ub = jax.random.uniform(k_mask, (B2_, 1), dtype=jnp.float32)
    refb = (xb.astype(jnp.float32) * (jnp.floor(0.5 + ub) / 0.5)).astype(jnp.bfloat16)
    np.testing.assert_allclose(np.asarray(ob, dtype=np.float32),
                               np.asarray(refb, dtype=np.float32), rtol=1e-2, atol=1e-2)

    print("KERNEL_OK")
</pallas_src>

<mosaic_0001>
module attributes {stable_mosaic.version = 11 : i64} {
  func.func @_drop_path_kernel(%arg0: i32, %arg1: i32, %arg2: memref<2x1xf32, #tpu.memory_space<vmem>>, %arg3: memref<2x1024xf32, #tpu.memory_space<vmem>>, %arg4: memref<2x1024xf32, #tpu.memory_space<vmem>>) attributes {dimension_semantics = [#tpu.dimension_semantics<parallel>, #tpu.dimension_semantics<parallel>], iteration_bounds = array<i64: 1, 1>, scalar_prefetch = 0 : i64, scratch_operands = 0 : i64, tpu.core_type = #tpu.core_type<tc>, window_params = [{pipeline_mode = #tpu.pipeline_mode<synchronous>, transform_indices = @transform_0, window_bounds = array<i64: 2, 1>}, {transform_indices = @transform_1, window_bounds = array<i64: 2, 1024>}, {transform_indices = @transform_2, window_bounds = array<i64: 2, 1024>}]} {
    %c0 = arith.constant 0 : index
    %c0_0 = arith.constant 0 : index
    %0 = vector.load %arg2[%c0, %c0_0] : memref<2x1xf32, #tpu.memory_space<vmem>>, vector<2x1xf32>
    %c0_1 = arith.constant 0 : index
    %c0_2 = arith.constant 0 : index
    %1 = vector.load %arg3[%c0_1, %c0_2] : memref<2x1024xf32, #tpu.memory_space<vmem>>, vector<2x1024xf32>
    %2 = vector.broadcast %0 : vector<2x1xf32> to vector<2x1024xf32>
    %3 = arith.mulf %1, %2 : vector<2x1024xf32>
    %c0_3 = arith.constant 0 : index
    %c0_4 = arith.constant 0 : index
    %4 = vector.load %arg4[%c0_3, %c0_4] : memref<2x1024xf32, #tpu.memory_space<vmem>>, vector<2x1024xf32>
    tpu.vector_store %arg4[%c0_3, %c0_4], %3 {strides = array<i32>} : memref<2x1024xf32, #tpu.memory_space<vmem>>, vector<2x1024xf32>,
    return
  }
  func.func @transform_0(%arg0: i32, %arg1: i32) -> (i32, i32) {
    %c0_i32 = arith.constant 0 : i32
    %c0_i32_0 = arith.constant 0 : i32
    %c0_i32_1 = arith.constant 0 : i32
    return %c0_i32, %c0_i32_0 : i32, i32
  }
  func.func @transform_1(%arg0: i32, %arg1: i32) -> (i32, i32) {
    %c0_i32 = arith.constant 0 : i32
    return %arg0, %arg1 : i32, i32
  }
  func.func @transform_2(%arg0: i32, %arg1: i32) -> (i32, i32) {
    %c0_i32 = arith.constant 0 : i32
    return %arg0, %arg1 : i32, i32
  }
}

</mosaic_0001>

<llo_original>
// kernel: tpu_custom_call.1
$region0: #{tpu_custom_call.1}
  #allocation0 [shape = 'u32[]', space=smem, size = 0x4, offset = 0x4, fixed_abs, tag = 'smem constant byte address 0x4 - core index']
  #allocation1 [shape = 'u32[72,128]{1,0:T(1,128)}', space=vmem, size = 0x9000, scoped, tag = 'internal scratch']
  %s0 = inlined_call_operand.vmem [shape: f32[2,1], index: 0, kind: input, shape index: {}]
  %s1 = inlined_call_operand.hbm [shape: f32[2,1024], index: 1, kind: input, shape index: {}]
  %s2 = inlined_call_operand.hbm [shape: f32[2,1024], index: 2, kind: output, shape index: {}]
  %s3 = sld [smem:[#allocation0]]
  $region22: #{tpu_custom_call.1} parent=0
    _
  %s5 = ssub.s32 1, %s3
  %s6 = scalar_select 0, %s5, %s3
  $region1: #{tpu_custom_call.1} parent=0
    #allocation2 [shape = 'u8[8192]{0}', space=vmem, size = 0x2000, scoped, tag = 'input window, operand 1, single buffered']
    #allocation3 [shape = 's32[1]{0}', space=sflag, size = 0x4, scoped, tag = 'scoped memory for tpu_custom_call.1']
    #allocation4 [shape = 's32[1]{0}', space=sflag, size = 0x4, scoped, tag = 'scoped memory for tpu_custom_call.1']
    #allocation5 [shape = 'u8[8192]{0}', space=vmem, size = 0x2000, scoped, tag = 'output window, operand 0, single buffered']
    %7 = vsyncpa [#allocation3], 0
    %8 = vsyncpa [#allocation4], 0
    // Predicated region
    $region2: #{tpu_custom_call.1} parent=1 // pred_check
      _
    $region3: #{tpu_custom_call.1} parent=1 // pred_check_branch
      %10 = sbr.rel (0) target = $region5
    $region4: #{tpu_custom_call.1} parent=1 // pred_region
      _
    $region5: #{tpu_custom_call.1} parent=1 // pred_fallthru
      _
    // Predicated region
    $region6: #{tpu_custom_call.1} parent=1 // pred_check
      _
    $region7: #{tpu_custom_call.1} parent=1 // pred_check_branch
      %12 = sbr.rel (0) target = $region9
    $region8: #{tpu_custom_call.1} parent=1 // pred_region
      %14 = vsyncadd [#allocation3], 0
      %s16 = sshll.u32 %s1, 4
      %s17 = int_to_ptr.hbm [resolvable:$true] %s16
      %s18 = sshll.u32 [#allocation2], 4
      %s19 = int_to_ptr.vmem [resolvable:$true] %s18
      %21 = dma.hbm_to_vmem [thread:$0]  %s17, 256, %s19, [#allocation3]
    $region9: #{tpu_custom_call.1} parent=1 // pred_fallthru
      _
    // Predicated region
    $region10: #{tpu_custom_call.1} parent=1 // pred_check
      _
    $region11: #{tpu_custom_call.1} parent=1 // pred_check_branch
      %23 = sbr.rel (0) target = $region13
    $region12: #{tpu_custom_call.1} parent=1 // pred_region
      %25 = dma.done [#allocation3], 256
    $region13: #{tpu_custom_call.1} parent=1 // pred_fallthru
      _
    %v26 = vld [vmem:[%s0] sm:$0x3]
    %v27 = vld [vmem:[#allocation2] sm:$0xff]
    %v28 = vld [vmem:[#allocation2 + $0x8] sm:$0xff]
    %30 = vset.pattern.permute.xlu0 0
    %31 = vperm.xlu0 %30, %v26
    %v32 = vpop.permute.xlu0 %31
    %v34 = vunpack.c.l.s4 269488144
    %v35 = vunpack.c.0.s8 %v34
    %v36 = vperm.slane %v32, %v35
    %v38 = vmul.f32 %v27, %v36
    %v39 = vmul.f32 %v28, %v36
    %40 = vst [vmem:[#allocation5] sm:$0xff] %v38
    %41 = vst [vmem:[#allocation5 + $0x8] sm:$0xff] %v39
    // Predicated region
    $region14: #{tpu_custom_call.1} parent=1 // pred_check
      _
    $region15: #{tpu_custom_call.1} parent=1 // pred_check_branch
      %43 = sbr.rel (0) target = $region17
    $region16: #{tpu_custom_call.1} parent=1 // pred_region
      %45 = vsyncadd [#allocation4], 0
      %s47 = sshll.u32 [#allocation5], 4
      %s48 = int_to_ptr.vmem [resolvable:$true] %s47
      %s49 = sshll.u32 %s2, 4
      %s50 = int_to_ptr.hbm [resolvable:$true] %s49
      %52 = dma.vmem_to_hbm [thread:$0]  %s48, 256, %s50, [#allocation4]
    $region17: #{tpu_custom_call.1} parent=1 // pred_fallthru
      _
    // Predicated region
    $region18: #{tpu_custom_call.1} parent=1 // pred_check
      _
    $region19: #{tpu_custom_call.1} parent=1 // pred_check_branch
      %54 = sbr.rel (0) target = $region21
    $region20: #{tpu_custom_call.1} parent=1 // pred_region
      %56 = dma.done [#allocation4], 256
    $region21: #{tpu_custom_call.1} parent=1 // pred_fallthru
      _
    %57 = vsyncpa [#allocation3], 1
    %58 = vsyncpa [#allocation4], 1

</llo_original>
